<compile_context>
chip_gen: v5e
topology: v5e:2x2
jax: 0.10.0
libtpu: 0.0.40
codegen_flags: <defaults>
</compile_context>

<pallas_src>
import functools

import numpy as np
import jax
import jax.numpy as jnp
from jax.experimental import pallas as pl
from jax.experimental.pallas import tpu as pltpu


def _round_up(a, m):
    return (a + m - 1) // m * m


def _vmem_capacity_bytes():
    """Best-effort per-core VMEM capacity; conservative (v7x) fallback."""
    cap = 64 * 2**20
    try:
        info = pltpu.get_tpu_info()
        cap = int(getattr(info, "vmem_capacity_bytes", cap))
    except Exception:
        pass
    return cap


def flow_kernel(x_ref, w_ref, b_ref, z_ref, logp_ref, *, logp_const):
    """One batch tile of the folded flow forward pass.

    x_ref    : VMEM (TB, F)       -- input tile (unpadded features)
    w_ref    : VMEM (F, F)        -- folded transform weight (resident)
    b_ref    : VMEM (1, F)        -- folded transform bias   (resident, f32)
    z_ref    : VMEM (TB, F)       -- output latent tile
    logp_ref : VMEM (1, 1, TB)    -- standard-normal log prob (lane-dense slab)
    """
    # Single MXU pass, f32 accumulation regardless of operand dtype.
    z = (jnp.dot(x_ref[...], w_ref[...], preferred_element_type=jnp.float32)
         + b_ref[...].astype(jnp.float32))
    z_ref[...] = z.astype(z_ref.dtype)

    # log_prob_standard: -0.5*d*log(2*pi) - 0.5 * sum(z^2, axis=-1)
    ss = jnp.sum(z * z, axis=-1)                       # (TB,), lane reduce
    logp_ref[...] = (logp_const - 0.5 * ss)[None, None, :].astype(logp_ref.dtype)


def flow_forward(x, weights, biases, *, tile_b=None, use_bf16_matmul=True):
    """Pallas implementation of Flow.forward for stacked linear transforms.

    Returns (z, logp, log_det) matching the PyTorch module's forward.
    With use_bf16_matmul=True (default, MXU fast path on v5e/v6e/v7x) the
    operands are bf16 with f32 accumulation; expect ~1e-2 relative error.
    """
    B, F = x.shape
    T = weights.shape[0]

    w32 = weights.astype(jnp.float32)
    b32 = biases.astype(jnp.float32)

    # Per-transform log|det W_t| summed; identical for every sample, so the
    # per-batch broadcast is done here rather than paying an output stream.
    # TODO(synk): slogdet (LU) of the transform weights stays in plain JAX.
    ld_sum = jnp.sum(jnp.linalg.slogdet(w32)[1])
    log_det = jnp.full((B,), ld_sum, dtype=jnp.float32)

    # ---- fold the affine chain:  z = x @ W_total + b_total (done once) ----
    w_total = w32[0]
    b_total = b32[0]
    for t in range(1, T):
        w_total = w_total @ w32[t]
        b_total = b_total @ w32[t] + b32[t]
    b_total = b_total.reshape(1, F)                    # keep params 2-D

    if use_bf16_matmul:
        # MXU peak wants bf16 operands; keep f32 accumulation in the kernel.
        x_stream = x.astype(jnp.bfloat16)
        w_k = w_total.astype(jnp.bfloat16)
    else:
        x_stream = x.astype(jnp.float32)
        w_k = w_total
    b_k = b_total                                      # bias stays f32

    # TODO(synk): for very large F the resident (F, F) folded weight would
    # need feature blocking; not implemented here.
    w_bytes = w_k.size * w_k.dtype.itemsize
    b_bytes = b_k.size * b_k.dtype.itemsize
    x_item = x_stream.dtype.itemsize
    z_item = x.dtype.itemsize

    def _vmem_est(tb):
        # resident weights + double-buffered x/z tiles + logp slab
        # + headroom for f32 matmul temporaries / Mosaic internal scratch.
        return (w_bytes + b_bytes
                + 2 * tb * F * x_item
                + 2 * tb * F * z_item
                + 2 * tb * 4
                + 3 * tb * F * 4)

    vmem_cap = _vmem_capacity_bytes()
    budget = min(int(0.75 * vmem_cap), 112 * 2**20)    # ~48MiB v7x, ~96MiB v5e/v6e

    # ---- choose batch tile (big tiles amortize ~0.35us/step overhead) ----
    if tile_b is None:
        tile_b = min(512, _round_up(B, 8))
        while tile_b > 8 and _vmem_est(tile_b) > budget:
            tile_b = max(8, _round_up(tile_b // 2, 8))
        # v7x has 2 TensorCores: make sure the "parallel" batch grid has at
        # least 2 steps whenever the batch allows it.
        if tile_b > 8 and _round_up(B, tile_b) == tile_b:
            tile_b = max(8, _round_up((B + 1) // 2, 8))

    B_pad = _round_up(B, tile_b)
    if B_pad != B:
        x_stream = jnp.pad(x_stream, ((0, B_pad - B), (0, 0)))
    num_tiles = B_pad // tile_b

    vmem_limit = int(min(max(int(1.25 * _vmem_est(tile_b)), 32 * 2**20),
                         int(0.85 * vmem_cap), 112 * 2**20))

    logp_const = float(-0.5 * F * np.log(2.0 * np.pi))
    kernel = functools.partial(flow_kernel, logp_const=logp_const)

    flops = 2 * B_pad * F * F + 3 * B_pad * F
    bytes_accessed = (x_stream.size * x_stream.dtype.itemsize
                      + w_bytes + b_bytes
                      + B_pad * F * z_item                 # z out
                      + B_pad * 4)                         # logp out

    z_pad, logp_pad = pl.pallas_call(
        kernel,
        out_shape=(
            jax.ShapeDtypeStruct((B_pad, F), x.dtype),
            jax.ShapeDtypeStruct((num_tiles, 1, tile_b), jnp.float32),
        ),
        grid_spec=pl.GridSpec(
            grid=(num_tiles,),
            in_specs=[
                pl.BlockSpec((tile_b, F), lambda i: (i, 0)),           # x tile
                # Grid-invariant folded params: whole-array, resident in VMEM.
                pl.BlockSpec(memory_space=pltpu.MemorySpace.VMEM),     # W_total
                pl.BlockSpec(memory_space=pltpu.MemorySpace.VMEM),     # b_total
            ],
            out_specs=[
                pl.BlockSpec((tile_b, F), lambda i: (i, 0)),           # z tile
                pl.BlockSpec((1, 1, tile_b), lambda i: (i, 0, 0)),     # logp slab
            ],
        ),
        compiler_params=pltpu.CompilerParams(
            dimension_semantics=("parallel",),
            vmem_limit_bytes=vmem_limit,
        ),
        cost_estimate=pl.CostEstimate(
            flops=int(flops), transcendentals=0,
            bytes_accessed=int(bytes_accessed)),
    )(x_stream, w_k, b_k)

    z = z_pad[:B, :]
    logp = logp_pad.reshape(-1)[:B]
    return z, logp, log_det


def flow_forward_ref(x, weights, biases):
    """Pure-JAX reference mirroring the PyTorch Flow.forward semantics."""
    z = x.astype(jnp.float32)
    B = x.shape[0]
    log_det = jnp.zeros((B,), jnp.float32)
    for t in range(weights.shape[0]):
        z = z @ weights[t] + biases[t]
        log_det = log_det + jnp.linalg.slogdet(weights[t])[1]
    d = z.shape[-1]
    logp = -0.5 * d * np.log(2.0 * np.pi) - 0.5 * jnp.sum(z * z, axis=-1)
    return z, logp, log_det


if __name__ == "__main__":
    key = jax.random.PRNGKey(0)
    k_x, k_w, k_b = jax.random.split(key, 3)

    B, F, T = 16, 32, 3  # batch, features, number of transforms

    x = jax.random.normal(k_x, (B, F), dtype=jnp.float32)
    # Well-conditioned, deterministically initialized invertible weights.
    weights = (jnp.eye(F, dtype=jnp.float32)[None, :, :]
               + 0.05 * jax.random.normal(k_w, (T, F, F), dtype=jnp.float32))
    biases = 0.01 * jax.random.normal(k_b, (T, F), dtype=jnp.float32)

    z_ref, logp_ref, ld_ref = flow_forward_ref(x, weights, biases)

    # Strict f32 path.
    z, logp, log_det = flow_forward(x, weights, biases, use_bf16_matmul=False)
    jax.block_until_ready((z, logp, log_det))
    np.testing.assert_allclose(np.asarray(z), np.asarray(z_ref), rtol=1e-4, atol=1e-4)
    np.testing.assert_allclose(np.asarray(logp), np.asarray(logp_ref), rtol=1e-4, atol=1e-4)
    np.testing.assert_allclose(np.asarray(log_det), np.asarray(ld_ref), rtol=1e-4, atol=1e-4)

    # Default bf16-operand / f32-accumulation fast path (loose tolerances).
    z_bf, logp_bf, ld_bf = flow_forward(x, weights, biases, use_bf16_matmul=True)
    jax.block_until_ready((z_bf, logp_bf, ld_bf))
    np.testing.assert_allclose(np.asarray(z_bf), np.asarray(z_ref), rtol=5e-2, atol=5e-2)
    np.testing.assert_allclose(np.asarray(logp_bf), np.asarray(logp_ref), rtol=3e-2, atol=1.0)
    np.testing.assert_allclose(np.asarray(ld_bf), np.asarray(ld_ref), rtol=1e-4, atol=1e-4)

    print("KERNEL_OK")
</pallas_src>

<mosaic_0001>
module attributes {stable_mosaic.version = 11 : i64} {
  func.func @flow_kernel(%arg0: i32, %arg1: memref<8x32xf32, #tpu.memory_space<vmem>>, %arg2: memref<32x32xf32, #tpu.memory_space<vmem>>, %arg3: memref<1x32xf32, #tpu.memory_space<vmem>>, %arg4: memref<8x32xf32, #tpu.memory_space<vmem>>, %arg5: memref<1x1x8xf32, #tpu.memory_space<vmem>>) attributes {dimension_semantics = [#tpu.dimension_semantics<parallel>], iteration_bounds = array<i64: 2>, scalar_prefetch = 0 : i64, scratch_operands = 0 : i64, tpu.core_type = #tpu.core_type<tc>, window_params = [{transform_indices = @transform_0, window_bounds = array<i64: 8, 32>}, {pipeline_mode = #tpu.pipeline_mode<synchronous>, transform_indices = @transform_1, window_bounds = array<i64: 32, 32>}, {pipeline_mode = #tpu.pipeline_mode<synchronous>, transform_indices = @transform_2, window_bounds = array<i64: 1, 32>}, {transform_indices = @transform_3, window_bounds = array<i64: 8, 32>}, {transform_indices = @transform_4, window_bounds = array<i64: 1, 1, 8>}]} {
    %c0 = arith.constant 0 : index
    %c0_0 = arith.constant 0 : index
    %0 = vector.load %arg1[%c0, %c0_0] : memref<8x32xf32, #tpu.memory_space<vmem>>, vector<8x32xf32>
    %c0_1 = arith.constant 0 : index
    %c0_2 = arith.constant 0 : index
    %1 = vector.load %arg2[%c0_1, %c0_2] : memref<32x32xf32, #tpu.memory_space<vmem>>, vector<32x32xf32>
    %cst = arith.constant dense<0.000000e+00> : vector<8x32xf32>
    %2 = tpu.matmul %0, %1, %cst {dimension_numbers = #tpu.dot_dimension_numbers<[1], [0], [0], [1], [0, 0, 1, 1], [], []>} : vector<8x32xf32>, vector<32x32xf32>, vector<8x32xf32> -> vector<8x32xf32>
    %c0_3 = arith.constant 0 : index
    %c0_4 = arith.constant 0 : index
    %3 = vector.load %arg3[%c0_3, %c0_4] : memref<1x32xf32, #tpu.memory_space<vmem>>, vector<1x32xf32>
    %4 = vector.broadcast %3 : vector<1x32xf32> to vector<8x32xf32>
    %5 = arith.addf %2, %4 : vector<8x32xf32>
    %c0_5 = arith.constant 0 : index
    %c0_6 = arith.constant 0 : index
    %6 = vector.load %arg4[%c0_5, %c0_6] : memref<8x32xf32, #tpu.memory_space<vmem>>, vector<8x32xf32>
    tpu.vector_store %arg4[%c0_5, %c0_6], %5 {strides = array<i32>} : memref<8x32xf32, #tpu.memory_space<vmem>>, vector<8x32xf32>,
    %7 = arith.mulf %5, %5 : vector<8x32xf32>
    %cst_7 = arith.constant dense<0.000000e+00> : vector<8xf32>
    %8 = vector.multi_reduction <add>, %7, %cst_7 [1] : vector<8x32xf32> to vector<8xf32>
    %cst_8 = arith.constant 5.000000e-01 : f32
    %9 = vector.broadcast %cst_8 : f32 to vector<8xf32>
    %10 = arith.mulf %9, %8 : vector<8xf32>
    %cst_9 = arith.constant -29.4060326 : f32
    %11 = vector.broadcast %cst_9 : f32 to vector<8xf32>
    %12 = arith.subf %11, %10 : vector<8xf32>
    %13 = vector.shape_cast %12 : vector<8xf32> to vector<1x1x8xf32>
    %c0_10 = arith.constant 0 : index
    %c0_11 = arith.constant 0 : index
    %c0_12 = arith.constant 0 : index
    %14 = vector.load %arg5[%c0_10, %c0_11, %c0_12] : memref<1x1x8xf32, #tpu.memory_space<vmem>>, vector<1x1x8xf32>
    tpu.vector_store %arg5[%c0_10, %c0_11, %c0_12], %13 {strides = array<i32>} : memref<1x1x8xf32, #tpu.memory_space<vmem>>, vector<1x1x8xf32>,
    return
  }
  func.func @transform_0(%arg0: i32) -> (i32, i32) {
    %c0_i32 = arith.constant 0 : i32
    %c0_i32_0 = arith.constant 0 : i32
    return %arg0, %c0_i32 : i32, i32
  }
  func.func @transform_1(%arg0: i32) -> (i32, i32) {
    %c0_i32 = arith.constant 0 : i32
    %c0_i32_0 = arith.constant 0 : i32
    %c0_i32_1 = arith.constant 0 : i32
    return %c0_i32, %c0_i32_0 : i32, i32
  }
  func.func @transform_2(%arg0: i32) -> (i32, i32) {
    %c0_i32 = arith.constant 0 : i32
    %c0_i32_0 = arith.constant 0 : i32
    %c0_i32_1 = arith.constant 0 : i32
    return %c0_i32, %c0_i32_0 : i32, i32
  }
  func.func @transform_3(%arg0: i32) -> (i32, i32) {
    %c0_i32 = arith.constant 0 : i32
    %c0_i32_0 = arith.constant 0 : i32
    return %arg0, %c0_i32 : i32, i32
  }
  func.func @transform_4(%arg0: i32) -> (i32, i32, i32) {
    %c0_i32 = arith.constant 0 : i32
    %c0_i32_0 = arith.constant 0 : i32
    %c0_i32_1 = arith.constant 0 : i32
    return %arg0, %c0_i32, %c0_i32_0 : i32, i32, i32
  }
}

</mosaic_0001>

<llo_original>
// kernel: tpu_custom_call.1
$region0: #{tpu_custom_call.1}
  #allocation0 [shape = 'u32[]', space=smem, size = 0x4, offset = 0x4, fixed_abs, tag = 'smem constant byte address 0x4 - core index']
  #allocation1 [shape = 'u32[72,128]{1,0:T(1,128)}', space=vmem, size = 0x9000, scoped, tag = 'internal scratch']
  %s0 = inlined_call_operand.hbm [shape: f32[16,32], index: 0, kind: input, shape index: {}]
  %s1 = inlined_call_operand.hbm [shape: f32[32,32], index: 1, kind: input, shape index: {}]
  %s2 = inlined_call_operand.vmem [shape: f32[1,32], index: 2, kind: input, shape index: {}]
  %s3 = inlined_call_operand.hbm [shape: f32[16,32], index: 3, kind: output, shape index: {0}]
  %s4 = inlined_call_operand.hbm [shape: f32[2,1,8], index: 4, kind: output, shape index: {1}]
  %5 = xla_tuple %s3, %s4
  %s6 = sld [smem:[#allocation0]]
  $region61: #{tpu_custom_call.1} parent=0
    _
  %s8 = ssub.s32 1, %s6
  %s9 = scalar_select 0, %s8, %s6
  $region1: #{tpu_custom_call.1} parent=0
    #allocation2 [shape = 'u8[8192]{0}', space=vmem, size = 0x2000, scoped, tag = 'input window, operand 0']
    #allocation3 [shape = 's32[2]{0}', space=sflag, size = 0x8, scoped, tag = 'scoped memory for tpu_custom_call.1']
    #allocation4 [shape = 's32[2]{0}', space=sflag, size = 0x8, scoped, tag = 'scoped memory for tpu_custom_call.1']
    #allocation5 [shape = 'u8[16384]{0}', space=vmem, size = 0x4000, scoped, tag = 'input window, operand 1, single buffered']
    #allocation6 [shape = 's32[1]{0}', space=sflag, size = 0x4, scoped, tag = 'scoped memory for tpu_custom_call.1']
    #allocation7 [shape = 'u8[8192]{0}', space=vmem, size = 0x2000, scoped, tag = 'output window, operand 0']
    #allocation8 [shape = 'u8[1024]{0}', space=vmem, size = 0x400, scoped, tag = 'output window, operand 1']
    #allocation9 [shape = 's32[2]{0}', space=sflag, size = 0x8, scoped, tag = 'scoped memory for tpu_custom_call.1']
    %10 = vsyncpa [#allocation3], 0
    %s11 = scalar_lea.sflag [#allocation3], 1
    %12 = vsyncpa %s11, 0
    %13 = vsyncpa [#allocation6], 0
    %14 = vsyncpa [#allocation4], 0
    %s15 = scalar_lea.sflag [#allocation4], 1
    %16 = vsyncpa %s15, 0
    %17 = vsyncpa [#allocation9], 0
    %s18 = scalar_lea.sflag [#allocation9], 1
    %19 = vsyncpa %s18, 0
    loop: start=0, step=1, limit=4
    $region2: #{tpu_custom_call.1} parent=1 // loop_pre_header
      _
    $region3: #{tpu_custom_call.1} parent=1 // loop_header
      %s21 = sphi 0, %s25
      %p22 = scmp.ge.s32.totalorder %s21, 4
      %s31 = sphi 0, %s33
      %s34 = sphi 0, %s31
      %s35 = sphi 0, %s34
      %s51 = sphi 0, %s35
      %s55 = sphi 0, %s55
      %s57 = sphi 0, %s55
      %s58 = sphi 0, %s57
      %s72 = sphi 0, %s58
      %s76 = sphi 0, %s76
      %s78 = sphi 0, %s76
      %s79 = sphi 0, %s78
      %s93 = sphi 0, %s79
      %s99 = sphi 0, %s101
      %s102 = sphi 0, %s99
      %s103 = sphi 0, %s102
      %s119 = sphi 0, %s103
      %s125 = sphi 0, %s127
      %s128 = sphi 0, %s125
      %s129 = sphi 0, %s128
      %s145 = sphi 0, %s129
    $region4: #{tpu_custom_call.1} parent=1 // loop_header_branch
      %24 = sbr.rel (%p22) target = $region8
    $region5: #{tpu_custom_call.1} parent=1 // loop_body
      %s26 = ssub.s32 %s21, 1
      %s27 = ssub.s32 %s21, 2
      %s28 = sadd.s32 %s21, 1
      %s29 = ssub.s32 %s21, %s28
      %p30 = scmp.eq.s32.totalorder %s29, 0
      %s32 = sadd.s32 %s31, 1
      %s33 = scalar_select %p30, %s31, %s32
      %p36 = pneg %p30
      %p37 = scmp.eq.s32.totalorder %s21, 1
      %p38 = por %p36, %p37
      %p39 = scmp.ne.s32.totalorder %s31, %s34
      %p40 = scmp.eq.s32.totalorder %s21, 0
      %p41 = por %p39, %p40
      %p42 = scmp.ne.s32.totalorder %s31, %s34
      %p43 = scmp.eq.s32.totalorder %s26, 1
      %p44 = por %p42, %p43
      %p45 = scmp.ne.s32.totalorder %s34, %s35
      %p46 = scmp.eq.s32.totalorder %s26, 0
      %p47 = por %p45, %p46
      %p48 = scmp.ne.s32.totalorder %s34, %s35
      %p49 = scmp.eq.s32.totalorder %s27, 1
      %p50 = por %p48, %p49
      %p52 = scmp.ne.s32.totalorder %s35, %s51
      %p53 = scmp.eq.s32.totalorder %s27, 0
      %p54 = por %p52, %p53
      %s56 = sadd.s32 %s55, 1
      %p59 = scmp.eq.s32.totalorder %s21, 1
      %p60 = scmp.ne.s32.totalorder %s55, %s57
      %p61 = scmp.eq.s32.totalorder %s21, 0
      %p62 = por %p60, %p61
      %p63 = scmp.ne.s32.totalorder %s55, %s57
      %p64 = scmp.eq.s32.totalorder %s26, 1
      %p65 = por %p63, %p64
      %p66 = scmp.ne.s32.totalorder %s57, %s58
      %p67 = scmp.eq.s32.totalorder %s26, 0
      %p68 = por %p66, %p67
      %p69 = scmp.ne.s32.totalorder %s57, %s58
      %p70 = scmp.eq.s32.totalorder %s27, 1
      %p71 = por %p69, %p70
      %p73 = scmp.ne.s32.totalorder %s58, %s72
      %p74 = scmp.eq.s32.totalorder %s27, 0
      %p75 = por %p73, %p74
      %s77 = sadd.s32 %s76, 1
      %p80 = scmp.eq.s32.totalorder %s21, 1
      %p81 = scmp.ne.s32.totalorder %s76, %s78
      %p82 = scmp.eq.s32.totalorder %s21, 0
      %p83 = por %p81, %p82
      %p84 = scmp.ne.s32.totalorder %s76, %s78
      %p85 = scmp.eq.s32.totalorder %s26, 1
      %p86 = por %p84, %p85
      %p87 = scmp.ne.s32.totalorder %s78, %s79
      %p88 = scmp.eq.s32.totalorder %s26, 0
      %p89 = por %p87, %p88
      %p90 = scmp.ne.s32.totalorder %s78, %s79
      %p91 = scmp.eq.s32.totalorder %s27, 1
      %p92 = por %p90, %p91
      %p94 = scmp.ne.s32.totalorder %s79, %s93
      %p95 = scmp.eq.s32.totalorder %s27, 0
      %p96 = por %p94, %p95
      %s97 = ssub.s32 %s21, %s28
      %p98 = scmp.eq.s32.totalorder %s97, 0
      %s100 = sadd.s32 %s99, 1
      %s101 = scalar_select %p98, %s99, %s100
      %p104 = pneg %p98
      %p105 = scmp.eq.s32.totalorder %s21, 1
      %p106 = por %p104, %p105
      %p107 = scmp.ne.s32.totalorder %s99, %s102
      %p108 = scmp.eq.s32.totalorder %s21, 0
      %p109 = por %p107, %p108
      %p110 = scmp.ne.s32.totalorder %s99, %s102
      %p111 = scmp.eq.s32.totalorder %s26, 1
      %p112 = por %p110, %p111
      %p113 = scmp.ne.s32.totalorder %s102, %s103
      %p114 = scmp.eq.s32.totalorder %s26, 0
      %p115 = por %p113, %p114
      %p116 = scmp.ne.s32.totalorder %s102, %s103
      %p117 = scmp.eq.s32.totalorder %s27, 1
      %p118 = por %p116, %p117
      %p120 = scmp.ne.s32.totalorder %s103, %s119
      %p121 = scmp.eq.s32.totalorder %s27, 0
      %p122 = por %p120, %p121
      %s123 = ssub.s32 %s21, %s28
      %p124 = scmp.eq.s32.totalorder %s123, 0
      %s126 = sadd.s32 %s125, 1
      %s127 = scalar_select %p124, %s125, %s126
      %p130 = pneg %p124
      %p131 = scmp.eq.s32.totalorder %s21, 1
      %p132 = por %p130, %p131
      %p133 = scmp.ne.s32.totalorder %s125, %s128
      %p134 = scmp.eq.s32.totalorder %s21, 0
      %p135 = por %p133, %p134
      %p136 = scmp.ne.s32.totalorder %s125, %s128
      %p137 = scmp.eq.s32.totalorder %s26, 1
      %p138 = por %p136, %p137
      %p139 = scmp.ne.s32.totalorder %s128, %s129
      %p140 = scmp.eq.s32.totalorder %s26, 0
      %p141 = por %p139, %p140
      %p142 = scmp.ne.s32.totalorder %s128, %s129
      %p143 = scmp.eq.s32.totalorder %s27, 1
      %p144 = por %p142, %p143
      %p146 = scmp.ne.s32.totalorder %s129, %s145
      %p147 = scmp.eq.s32.totalorder %s27, 0
      %p148 = por %p146, %p147
      %p149 = scmp.le.s32.totalorder 1, %s21
      %p150 = scmp.lt.s32.totalorder %s21, 3
      %p151 = pnand %p149, %p150
      %p152 = pneg %p151
      // Predicated region
      $region9: #{tpu_custom_call.1} parent=5 // pred_check
        _
      $region10: #{tpu_custom_call.1} parent=5 // pred_check_branch
        %154 = sbr.rel (%p151) target = $region12
      $region11: #{tpu_custom_call.1} parent=5 // pred_region
        %s155 = ssub.s32 %s21, 1
        // Predicated region
        $region13: #{tpu_custom_call.1} parent=11 // pred_check
          %p156 = pneg %p68
        $region14: #{tpu_custom_call.1} parent=11 // pred_check_branch
          %158 = sbr.rel (%p156) target = $region16
        $region15: #{tpu_custom_call.1} parent=11 // pred_region
          %160 = vsyncadd [#allocation6], 0
          %s161 = sshll.u32 %s1, 4
          %s162 = int_to_ptr.hbm [resolvable:$true] %s161
          %s163 = sshll.u32 [#allocation5], 4
          %s164 = int_to_ptr.vmem [resolvable:$true] %s163
          %169 = dma.hbm_to_vmem [thread:$0]  %s162, 512, %s164, [#allocation6], 128, 128, 8
        $region16: #{tpu_custom_call.1} parent=11 // pred_fallthru
          _
        // Predicated region
        $region17: #{tpu_custom_call.1} parent=11 // pred_check
          %p170 = pneg %p89
        $region18: #{tpu_custom_call.1} parent=11 // pred_check_branch
          %172 = sbr.rel (%p170) target = $region20
        $region19: #{tpu_custom_call.1} parent=11 // pred_region
          _
        $region20: #{tpu_custom_call.1} parent=11 // pred_fallthru
          _
      $region12: #{tpu_custom_call.1} parent=5 // pred_fallthru
        _
      %p173 = scmp.lt.s32.totalorder %s21, 2
      // Predicated region
      $region21: #{tpu_custom_call.1} parent=5 // pred_check
        %p174 = pneg %p173
      $region22: #{tpu_custom_call.1} parent=5 // pred_check_branch
        %176 = sbr.rel (%p174) target = $region24
      $region23: #{tpu_custom_call.1} parent=5 // pred_region
        // Predicated region
        $region25: #{tpu_custom_call.1} parent=23 // pred_check
          %p177 = pneg %p41
        $region26: #{tpu_custom_call.1} parent=23 // pred_check_branch
          %179 = sbr.rel (%p177) target = $region28
        $region27: #{tpu_custom_call.1} parent=23 // pred_region
          %s180 = sand.u32 %s31, 1
          %s181 = scalar_lea.sflag [#allocation3], %s180
          %s182 = sand.u32 %s31, 1
          %s183 = smul.addr %s182, 8
          %s184 = scalar_lea.vmem [#allocation2], %s183
          %186 = vsyncadd %s181, 0
          %s187 = smul.addr %s21, 8
          %s188 = scalar_lea.hbm %s0, %s187
          %s190 = sshll.u32 %s188, 4
          %s191 = int_to_ptr.hbm [resolvable:$true] %s190
          %s192 = sshll.u32 %s184, 4
          %s193 = int_to_ptr.vmem [resolvable:$true] %s192
          %195 = dma.hbm_to_vmem [thread:$0]  %s191, 128, %s193, %s181
        $region28: #{tpu_custom_call.1} parent=23 // pred_fallthru
          _
      $region24: #{tpu_custom_call.1} parent=5 // pred_fallthru
        _
      %p196 = scmp.le.s32.totalorder 1, %s21
      %p197 = scmp.lt.s32.totalorder %s21, 3
      %p198 = pnand %p196, %p197
      %p199 = pneg %p198
      // Predicated region
      $region29: #{tpu_custom_call.1} parent=5 // pred_check
        _
      $region30: #{tpu_custom_call.1} parent=5 // pred_check_branch
        %201 = sbr.rel (%p198) target = $region32
      $region31: #{tpu_custom_call.1} parent=5 // pred_region
        %s202 = ssub.s32 %s21, 1
        %s203 = sand.u32 %s34, 1
        %s204 = scalar_lea.sflag [#allocation3], %s203
        %s205 = sand.u32 %s34, 1
        %s206 = smul.addr %s205, 8
        %s207 = scalar_lea.vmem [#allocation2], %s206
        // Predicated region
        $region33: #{tpu_custom_call.1} parent=31 // pred_check
          %p208 = pneg %p47
        $region34: #{tpu_custom_call.1} parent=31 // pred_check_branch
          %210 = sbr.rel (%p208) target = $region36
        $region35: #{tpu_custom_call.1} parent=31 // pred_region
          %212 = dma.done %s204, 128
        $region36: #{tpu_custom_call.1} parent=31 // pred_fallthru
          _
        // Predicated region
        $region37: #{tpu_custom_call.1} parent=31 // pred_check
          %p213 = pneg %p68
        $region38: #{tpu_custom_call.1} parent=31 // pred_check_branch
          %215 = sbr.rel (%p213) target = $region40
        $region39: #{tpu_custom_call.1} parent=31 // pred_region
          %217 = dma.done [#allocation6], 512
        $region40: #{tpu_custom_call.1} parent=31 // pred_fallthru
          _
        %s218 = sand.u32 %s34, 1
        %s219 = scalar_lea.sflag [#allocation3], %s218
        %s220 = sand.u32 %s34, 1
        %s221 = smul.addr %s220, 8
        %s222 = scalar_lea.vmem [#allocation2], %s221
        %p223 = pneg %p47
        %p224 = pneg %p44
        %p225 = pneg %p68
        %p226 = pneg %p65
        %p227 = pneg %p89
        %p228 = pneg %p86
        %p229 = pneg %p115
        %p230 = pneg %p112
        %s231 = sand.u32 %s102, 1
        %s232 = scalar_lea.sflag [#allocation4], %s231
        %s233 = sand.u32 %s102, 1
        %s234 = smul.addr %s233, 8
        %s235 = scalar_lea.vmem [#allocation7], %s234
        %p236 = pneg %p141
        %p237 = pneg %p138
        %s238 = sand.u32 %s128, 1
        %s239 = scalar_lea.sflag [#allocation9], %s238
        %s240 = sand.u32 %s128, 1
        %s241 = scalar_lea.vmem [#allocation8], %s240
        %v242 = vld [vmem:[%s207] sm:$0xff]
        %v243 = vld [vmem:[#allocation5] sm:$0xff]
        %v244 = vld [vmem:[#allocation5 + $0x8] sm:$0xff]
        %v245 = vld [vmem:[#allocation5 + $0x10] sm:$0xff]
        %v246 = vld [vmem:[#allocation5 + $0x18] sm:$0xff]
        %v247 = vld [vmem:[%s2] sm:$0x1]
        %v249 = vperm.slane %v247, 0
        %vm251 = vcmask 261120
        %v253 = vsel %vm251, %v242, 0
        %255 = vmatpush.msra.mxu0 0.0
        %256 = vmatpush.msra.mxu0 0.0
        %257 = vmatpush.msra.mxu0 0.0
        %258 = vmatpush.msra.mxu0 0.0
        %259 = vmatpush.msra.mxu0 0.0
        %260 = vmatpush.msra.mxu0 0.0
        %261 = vmatpush.msra.mxu0 0.0
        %262 = vmatpush.msra.mxu0 0.0
        %263 = vmatpush.msra.mxu0 0.0
        %264 = vmatpush.msra.mxu0 0.0
        %265 = vmatpush.msra.mxu0 0.0
        %266 = vmatpush.msra.mxu0 0.0
        %267 = vmatpush.msra.mxu0 %v246
        %268 = vmatpush.msra.mxu0 %v245
        %269 = vmatpush.msra.mxu0 %v244
        %270 = vmatpush.msra.mxu0 %v243
        %271 = vmatmul.f32.gmra.mxu0 %v253
        %v272 = vpop.f32.mrf.mxu0
        %v273 = vadd.f32 %v249, %v272
        %274 = vdwg.mxu0
        %275 = vst.msk [vmem:[%s235] sm:$0xff] %vm251, %v273
        %v276 = vmul.f32 %v273, %v273
        %v277 = vsel %vm251, %v276, 0.0
        %278 = vadd.xlane.f32.xlu0 %v277
        %v279 = vpop.xlane.xlu0 %278
        %v280 = vmul.f32 %v279, 0.5
        %v281 = vsub.f32 -29.406033, %v280
        %v283 = vlaneseq
        %v284 = vand.u32 %v283, 127
        %v285 = vperm.slane %v281, %v284
        %vm287 = vcmask 57344
        %288 = vst.msk [vmem:[%s241] sm:$0x1] %vm287, %v285
        %s289 = sand.u32 %s102, 1
        %s290 = scalar_lea.sflag [#allocation4], %s289
        %s291 = sand.u32 %s102, 1
        %s292 = smul.addr %s291, 8
        %s293 = scalar_lea.vmem [#allocation7], %s292
        %s294 = sand.u32 %s128, 1
        %s295 = scalar_lea.sflag [#allocation9], %s294
        %s296 = sand.u32 %s128, 1
        %s297 = scalar_lea.vmem [#allocation8], %s296
        // Predicated region
        $region41: #{tpu_custom_call.1} parent=31 // pred_check
          %p298 = pneg %p112
        $region42: #{tpu_custom_call.1} parent=31 // pred_check_branch
          %300 = sbr.rel (%p298) target = $region44
        $region43: #{tpu_custom_call.1} parent=31 // pred_region
          %302 = vsyncadd %s290, 0
          %s303 = smul.addr %s26, 8
          %s304 = scalar_lea.hbm %s3, %s303
          %s306 = sshll.u32 %s293, 4
          %s307 = int_to_ptr.vmem [resolvable:$true] %s306
          %s308 = sshll.u32 %s304, 4
          %s309 = int_to_ptr.hbm [resolvable:$true] %s308
          %311 = dma.vmem_to_hbm [thread:$0]  %s307, 128, %s309, %s290
        $region44: #{tpu_custom_call.1} parent=31 // pred_fallthru
          _
        // Predicated region
        $region45: #{tpu_custom_call.1} parent=31 // pred_check
          %p312 = pneg %p138
        $region46: #{tpu_custom_call.1} parent=31 // pred_check_branch
          %314 = sbr.rel (%p312) target = $region48
        $region47: #{tpu_custom_call.1} parent=31 // pred_region
          %316 = vsyncadd %s295, 0
          %s317 = scalar_lea.hbm %s4, %s26
          %s319 = sshll.u32 %s297, 4
          %s320 = int_to_ptr.vmem [resolvable:$true] %s319
          %s321 = sshll.u32 %s317, 4
          %s322 = int_to_ptr.hbm [resolvable:$true] %s321
          %324 = dma.vmem_to_hbm [thread:$0]  %s320, 16, %s322, %s295
        $region48: #{tpu_custom_call.1} parent=31 // pred_fallthru
          _
      $region32: #{tpu_custom_call.1} parent=5 // pred_fallthru
        _
      %p325 = scmp.le.s32.totalorder 2, %s21
      // Predicated region
      $region49: #{tpu_custom_call.1} parent=5 // pred_check
        %p326 = pneg %p325
      $region50: #{tpu_custom_call.1} parent=5 // pred_check_branch
        %328 = sbr.rel (%p326) target = $region52
      $region51: #{tpu_custom_call.1} parent=5 // pred_region
        %s329 = ssub.s32 %s21, 2
        // Predicated region
        $region53: #{tpu_custom_call.1} parent=51 // pred_check
          %p330 = pneg %p118
        $region54: #{tpu_custom_call.1} parent=51 // pred_check_branch
          %332 = sbr.rel (%p330) target = $region56
        $region55: #{tpu_custom_call.1} parent=51 // pred_region
          %s333 = sand.u32 %s103, 1
          %s334 = scalar_lea.sflag [#allocation4], %s333
          %s335 = sand.u32 %s103, 1
          %s336 = smul.addr %s335, 8
          %s337 = scalar_lea.vmem [#allocation7], %s336
          %339 = dma.done %s334, 128
        $region56: #{tpu_custom_call.1} parent=51 // pred_fallthru
          _
        // Predicated region
        $region57: #{tpu_custom_call.1} parent=51 // pred_check
          %p340 = pneg %p144
        $region58: #{tpu_custom_call.1} parent=51 // pred_check_branch
          %342 = sbr.rel (%p340) target = $region60
        $region59: #{tpu_custom_call.1} parent=51 // pred_region
          %s343 = sand.u32 %s129, 1
          %s344 = scalar_lea.sflag [#allocation9], %s343
          %s345 = sand.u32 %s129, 1
          %s346 = scalar_lea.vmem [#allocation8], %s345
          %348 = dma.done %s344, 16
        $region60: #{tpu_custom_call.1} parent=51 // pred_fallthru
          _
      $region52: #{tpu_custom_call.1} parent=5 // pred_fallthru
        _
    $region6: #{tpu_custom_call.1} parent=1 // loop_footer
      %s25 = sadd.s32 1, %s21
    $region7: #{tpu_custom_call.1} parent=1 // loop_footer_branch
      %20 = sbr.rel target = $region3
    $region8: #{tpu_custom_call.1} parent=1 // loop_exit
      _
    %349 = vsyncpa [#allocation3], 1
    %s350 = scalar_lea.sflag [#allocation3], 1
    %351 = vsyncpa %s350, 1
    %352 = vsyncpa [#allocation6], 1
    %353 = vsyncpa [#allocation4], 1
    %s354 = scalar_lea.sflag [#allocation4], 1
    %355 = vsyncpa %s354, 1
    %356 = vsyncpa [#allocation9], 1
    %s357 = scalar_lea.sflag [#allocation9], 1
    %358 = vsyncpa %s357, 1

</llo_original>
